<compile_context>
chip_gen: v7x
topology: tpu7x:2x2x1
jax: 0.10.0
libtpu: 0.0.40
codegen_flags: <defaults>
</compile_context>

<pallas_src>
import jax
import jax.numpy as jnp
from jax.experimental import pallas as pl
from jax.experimental.pallas import tpu as pltpu


def _round_up(v, m):
    return ((v + m - 1) // m) * m


def _tpu_defaults():
    """Per-generation (tm, tn, tk, physical VMEM bytes)."""
    kind = ""
    try:
        kind = jax.devices()[0].device_kind.lower()
    except Exception:
        pass
    vmem_phys = None
    try:
        vmem_phys = int(pltpu.get_tpu_info().vmem_capacity_bytes)
    except Exception:
        vmem_phys = None

    if "v7" in kind or "7x" in kind:
        tm, tn, tk, phys = 512, 1024, 512, 64 << 20     # lower ridge, 64 MiB VMEM
    elif "v6" in kind:
        tm, tn, tk, phys = 1024, 2048, 512, 128 << 20   # highest ridge (~680 f/B)
    elif "v5" in kind:
        tm, tn, tk, phys = 512, 1024, 512, 128 << 20    # ridge ~240 f/B
    else:
        tm, tn, tk, phys = 512, 1024, 512, 64 << 20     # conservative default

    if vmem_phys:
        phys = vmem_phys
    return tm, tn, tk, phys


def lora_kernel(x_ref, wt_ref, bias_ref, xb_ref, at_ref, o_ref, acc_ref):
    """Base GEMM accumulate over K; bias + LoRA second stage in the epilogue."""
    k = pl.program_id(2)

    @pl.when(k == 0)
    def _init():
        acc_ref[...] = jnp.zeros_like(acc_ref)

    # Frozen base layer partial product: x_k @ W^T_k -> (tm, tn), f32 accum.
    acc_ref[...] += jnp.dot(x_ref[...], wt_ref[...],
                            preferred_element_type=jnp.float32)

    @pl.when(k == pl.num_programs(2) - 1)
    def _epilogue():
        # LoRA second stage on the wrapper-precomputed (x @ B^T); A^T was
        # pre-scaled by alpha/r in the wrapper, so no extra VPU multiply here.
        delta = jnp.dot(xb_ref[...], at_ref[...],
                        preferred_element_type=jnp.float32)
        o_ref[...] = (acc_ref[...] + bias_ref[...] + delta).astype(o_ref.dtype)


def lora_forward(x, W, bias, A, B, *, r, alpha,
                 tm=None, tn=None, tk=None,
                 compute_dtype=jnp.bfloat16, out_dtype=None,
                 force_kernel=False):
    """x: (batch, seq, hidden); W: (out, hidden); bias: (out,);
    A: (out, r); B: (r, hidden). Returns (batch, seq, out)."""
    bsz, seq, hidden = x.shape
    out_features = W.shape[0]
    M = bsz * seq
    scale = float(alpha) / float(r)
    out_dtype = x.dtype if out_dtype is None else jnp.dtype(out_dtype)

    x2 = x.reshape(M, hidden)

    # Small-problem fallback: when padded-to-tile work would be dominated by
    # zero padding and per-grid-step overhead, plain XLA wins on every gen.
    if not force_kernel and (M < 256 or hidden < 256 or out_features < 256):
        out = (x2 @ W.T + bias) + scale * ((x2 @ B.T) @ A.T)
        return out.astype(out_dtype).reshape(bsz, seq, out_features)

    # NOTE (inference-only option): if W/A/B are static at call time, folding
    # W_eff = W + scale * (A @ B) once and running a single GEMM is even
    # cheaper; kept separate here so the kernel stays valid during training.

    d_tm, d_tn, d_tk, vmem_phys = _tpu_defaults()
    tm = d_tm if tm is None else tm
    tn = d_tn if tn is None else tn
    tk = d_tk if tk is None else tk

    # Clamp tile sizes to the lane/sublane-aligned problem size.
    tm = min(tm, _round_up(M, 16))            # rows: bf16-safe sublane multiple
    tk = min(tk, _round_up(hidden, 128))      # contraction: lane axis of x
    tn = min(tn, _round_up(out_features, 128))
    r_pad = _round_up(r, 128)                 # full-width lanes for LoRA stage 2

    M_pad = _round_up(M, tm)
    H_pad = _round_up(hidden, tk)
    O_pad = _round_up(out_features, tn)
    k_steps = H_pad // tk

    cdt = jnp.dtype(compute_dtype)

    # LoRA first stage once, in f32 (same precision as an in-kernel f32
    # accumulator), then cast to the MXU compute dtype.
    xb = x2.astype(jnp.float32) @ B.T.astype(jnp.float32)            # (M, r)

    # Zero-padded, pre-transposed operands (zero padding contributes exactly 0).
    x_p = jnp.pad(x2, ((0, M_pad - M), (0, H_pad - hidden))).astype(cdt)
    wt_p = jnp.pad(W.T, ((0, H_pad - hidden),
                         (0, O_pad - out_features))).astype(cdt)
    xb_p = jnp.pad(xb, ((0, M_pad - M), (0, r_pad - r))).astype(cdt)
    at_p = jnp.pad(A.T * scale, ((0, r_pad - r),
                                 (0, O_pad - out_features))).astype(cdt)
    b_p = jnp.pad(bias.astype(jnp.float32),
                  (0, O_pad - out_features)).reshape(1, O_pad)

    grid = (M_pad // tm, O_pad // tn, k_steps)

    # W^T is the one streamed operand; deepen its pipeline when the K loop is
    # long enough for exposed per-step DMA to matter.
    wt_spec = pl.BlockSpec((tk, tn), lambda i, j, k: (k, j))
    wt_bufs = 2
    if k_steps >= 3:
        try:
            wt_spec = pl.BlockSpec((tk, tn), lambda i, j, k: (k, j),
                                   pipeline_mode=pl.Buffered(3))
            wt_bufs = 3
        except TypeError:
            pass  # older pallas without pipeline_mode: default double-buffer

    # VMEM budget: multi-buffered inputs/outputs + f32 scratch accumulator,
    # 2x headroom, capped generation-aware at ~75% of physical VMEM.
    cb = cdt.itemsize
    ob = jnp.dtype(out_dtype).itemsize
    est = ((2 * tm * tk + wt_bufs * tk * tn + 2 * tm * r_pad + 2 * r_pad * tn) * cb
           + 2 * tn * 4                       # bias (f32)
           + 2 * tm * tn * ob                 # output tile
           + tm * tn * 4)                     # f32 accumulator scratch
    vmem_limit = int(min(max(32 << 20, 2 * est + (4 << 20)),
                         int(0.75 * vmem_phys)))

    out = pl.pallas_call(
        lora_kernel,
        out_shape=jax.ShapeDtypeStruct((M_pad, O_pad), out_dtype),
        grid_spec=pltpu.PrefetchScalarGridSpec(
            num_scalar_prefetch=0,
            grid=grid,
            in_specs=[
                pl.BlockSpec((tm, tk), lambda i, j, k: (i, k)),       # x
                wt_spec,                                              # W^T
                pl.BlockSpec((1, tn), lambda i, j, k: (0, j)),        # bias (f32)
                pl.BlockSpec((tm, r_pad), lambda i, j, k: (i, 0)),    # x @ B^T
                pl.BlockSpec((r_pad, tn), lambda i, j, k: (0, j)),    # A^T*alpha/r
            ],
            out_specs=pl.BlockSpec((tm, tn), lambda i, j, k: (i, j)),
            scratch_shapes=[
                pltpu.VMEM((tm, tn), jnp.float32),    # base-matmul accumulator
            ],
        ),
        compiler_params=pltpu.CompilerParams(
            dimension_semantics=("parallel", "parallel", "arbitrary"),
            vmem_limit_bytes=vmem_limit,
        ),
    )(x_p, wt_p, b_p, xb_p, at_p)

    return out[:M, :out_features].reshape(bsz, seq, out_features)


if __name__ == "__main__":
    # Small shapes implied by the module forward: (batch, seq, hidden) input,
    # original_layer = Linear(hidden -> out_features).
    batch, seq, hidden, out_features = 2, 8, 32, 32
    r, alpha = 4, 8.0

    key = jax.random.PRNGKey(0)
    kx, kw, kb, ka, kbm = jax.random.split(key, 5)

    x = jax.random.normal(kx, (batch, seq, hidden), dtype=jnp.float32)
    # Frozen original Linear layer parameters (deterministic synthetic init).
    W = jax.random.normal(kw, (out_features, hidden), dtype=jnp.float32) * 0.05
    bias = jax.random.normal(kb, (out_features,), dtype=jnp.float32) * 0.05
    # LoRA params, matching torch.randn(...) * 0.01 scaling.
    A = jax.random.normal(ka, (out_features, r), dtype=jnp.float32) * 0.01
    B = jax.random.normal(kbm, (r, hidden), dtype=jnp.float32) * 0.01

    # force_kernel=True so the Pallas kernel itself runs at these small shapes
    # (the production path would take the jnp small-problem fallback here).
    y = lora_forward(x, W, bias, A, B, r=r, alpha=alpha, force_kernel=True)
    y = jax.block_until_ready(y)

    # Pure-JAX f32 reference for a sanity check of the fused kernel.
    x2 = x.reshape(-1, hidden)
    ref = (x2 @ W.T + bias) + (alpha / r) * (x2 @ B.T @ A.T)
    ref = ref.reshape(batch, seq, out_features)

    assert y.shape == (batch, seq, out_features)
    # Kernel runs bf16 operands with f32 accumulation -> bf16-level tolerance.
    err = float(jnp.max(jnp.abs(y - ref)))
    assert jnp.allclose(y, ref, atol=2e-2, rtol=2e-2), err
    print("KERNEL_OK")
</pallas_src>

<mosaic_0001>
module attributes {stable_mosaic.version = 11 : i64} {
  func.func @lora_kernel(%arg0: i32, %arg1: i32, %arg2: i32, %arg3: memref<16x128xbf16, #tpu.memory_space<vmem>>, %arg4: memref<128x128xbf16, #tpu.memory_space<vmem>>, %arg5: memref<1x128xf32, #tpu.memory_space<vmem>>, %arg6: memref<16x128xbf16, #tpu.memory_space<vmem>>, %arg7: memref<128x128xbf16, #tpu.memory_space<vmem>>, %arg8: memref<16x128xf32, #tpu.memory_space<vmem>>, %arg9: memref<16x128xf32, #tpu.memory_space<vmem>>) attributes {dimension_semantics = [#tpu.dimension_semantics<parallel>, #tpu.dimension_semantics<parallel>, #tpu.dimension_semantics<arbitrary>], iteration_bounds = array<i64: 1, 1, 1>, scalar_prefetch = 0 : i64, scratch_operands = 1 : i64, tpu.core_type = #tpu.core_type<tc>, window_params = [{transform_indices = @transform_0, window_bounds = array<i64: 16, 128>}, {transform_indices = @transform_1, window_bounds = array<i64: 128, 128>}, {transform_indices = @transform_2, window_bounds = array<i64: 1, 128>}, {transform_indices = @transform_3, window_bounds = array<i64: 16, 128>}, {transform_indices = @transform_4, window_bounds = array<i64: 128, 128>}, {transform_indices = @transform_5, window_bounds = array<i64: 16, 128>}]} {
    %c0_i32 = arith.constant 0 : i32
    %0 = arith.cmpi eq, %arg2, %c0_i32 : i32
    %1 = arith.extui %0 : i1 to i32
    %c0_i32_0 = arith.constant 0 : i32
    %2 = arith.cmpi ne, %1, %c0_i32_0 : i32
    scf.if %2 {
      %cst_10 = arith.constant 0.000000e+00 : f32
      %12 = vector.broadcast %cst_10 : f32 to vector<16x128xf32>
      %c0_11 = arith.constant 0 : index
      %c0_12 = arith.constant 0 : index
      %13 = vector.load %arg9[%c0_11, %c0_12] : memref<16x128xf32, #tpu.memory_space<vmem>>, vector<16x128xf32>
      tpu.vector_store %arg9[%c0_11, %c0_12], %12 {strides = array<i32>} : memref<16x128xf32, #tpu.memory_space<vmem>>, vector<16x128xf32>,
    } else {
    }
    %c0 = arith.constant 0 : index
    %c0_1 = arith.constant 0 : index
    %3 = vector.load %arg9[%c0, %c0_1] : memref<16x128xf32, #tpu.memory_space<vmem>>, vector<16x128xf32>
    %c0_2 = arith.constant 0 : index
    %c0_3 = arith.constant 0 : index
    %4 = vector.load %arg3[%c0_2, %c0_3] : memref<16x128xbf16, #tpu.memory_space<vmem>>, vector<16x128xbf16>
    %c0_4 = arith.constant 0 : index
    %c0_5 = arith.constant 0 : index
    %5 = vector.load %arg4[%c0_4, %c0_5] : memref<128x128xbf16, #tpu.memory_space<vmem>>, vector<128x128xbf16>
    %cst = arith.constant dense<0.000000e+00> : vector<16x128xf32>
    %6 = tpu.matmul %4, %5, %cst {dimension_numbers = #tpu.dot_dimension_numbers<[1], [0], [0], [1], [0, 0, 1, 1], [], []>} : vector<16x128xbf16>, vector<128x128xbf16>, vector<16x128xf32> -> vector<16x128xf32>
    %7 = arith.addf %3, %6 : vector<16x128xf32>
    %c0_6 = arith.constant 0 : index
    %c0_7 = arith.constant 0 : index
    %8 = vector.load %arg9[%c0_6, %c0_7] : memref<16x128xf32, #tpu.memory_space<vmem>>, vector<16x128xf32>
    tpu.vector_store %arg9[%c0_6, %c0_7], %7 {strides = array<i32>} : memref<16x128xf32, #tpu.memory_space<vmem>>, vector<16x128xf32>,
    %c0_i32_8 = arith.constant 0 : i32
    %9 = arith.cmpi eq, %arg2, %c0_i32_8 : i32
    %10 = arith.extui %9 : i1 to i32
    %c0_i32_9 = arith.constant 0 : i32
    %11 = arith.cmpi ne, %10, %c0_i32_9 : i32
    scf.if %11 {
      %c0_10 = arith.constant 0 : index
      %c0_11 = arith.constant 0 : index
      %12 = vector.load %arg6[%c0_10, %c0_11] : memref<16x128xbf16, #tpu.memory_space<vmem>>, vector<16x128xbf16>
      %c0_12 = arith.constant 0 : index
      %c0_13 = arith.constant 0 : index
      %13 = vector.load %arg7[%c0_12, %c0_13] : memref<128x128xbf16, #tpu.memory_space<vmem>>, vector<128x128xbf16>
      %cst_14 = arith.constant dense<0.000000e+00> : vector<16x128xf32>
      %14 = tpu.matmul %12, %13, %cst_14 {dimension_numbers = #tpu.dot_dimension_numbers<[1], [0], [0], [1], [0, 0, 1, 1], [], []>} : vector<16x128xbf16>, vector<128x128xbf16>, vector<16x128xf32> -> vector<16x128xf32>
      %c0_15 = arith.constant 0 : index
      %c0_16 = arith.constant 0 : index
      %15 = vector.load %arg9[%c0_15, %c0_16] : memref<16x128xf32, #tpu.memory_space<vmem>>, vector<16x128xf32>
      %c0_17 = arith.constant 0 : index
      %c0_18 = arith.constant 0 : index
      %16 = vector.load %arg5[%c0_17, %c0_18] : memref<1x128xf32, #tpu.memory_space<vmem>>, vector<1x128xf32>
      %17 = vector.broadcast %16 : vector<1x128xf32> to vector<16x128xf32>
      %18 = arith.addf %15, %17 : vector<16x128xf32>
      %19 = arith.addf %18, %14 : vector<16x128xf32>
      %c0_19 = arith.constant 0 : index
      %c0_20 = arith.constant 0 : index
      %20 = vector.load %arg8[%c0_19, %c0_20] : memref<16x128xf32, #tpu.memory_space<vmem>>, vector<16x128xf32>
      tpu.vector_store %arg8[%c0_19, %c0_20], %19 {strides = array<i32>} : memref<16x128xf32, #tpu.memory_space<vmem>>, vector<16x128xf32>,
    } else {
    }
    return
  }
  func.func @transform_0(%arg0: i32, %arg1: i32, %arg2: i32) -> (i32, i32) {
    %c0_i32 = arith.constant 0 : i32
    return %arg0, %arg2 : i32, i32
  }
  func.func @transform_1(%arg0: i32, %arg1: i32, %arg2: i32) -> (i32, i32) {
    %c0_i32 = arith.constant 0 : i32
    return %arg2, %arg1 : i32, i32
  }
  func.func @transform_2(%arg0: i32, %arg1: i32, %arg2: i32) -> (i32, i32) {
    %c0_i32 = arith.constant 0 : i32
    %c0_i32_0 = arith.constant 0 : i32
    return %c0_i32, %arg1 : i32, i32
  }
  func.func @transform_3(%arg0: i32, %arg1: i32, %arg2: i32) -> (i32, i32) {
    %c0_i32 = arith.constant 0 : i32
    %c0_i32_0 = arith.constant 0 : i32
    return %arg0, %c0_i32 : i32, i32
  }
  func.func @transform_4(%arg0: i32, %arg1: i32, %arg2: i32) -> (i32, i32) {
    %c0_i32 = arith.constant 0 : i32
    %c0_i32_0 = arith.constant 0 : i32
    return %c0_i32, %arg1 : i32, i32
  }
  func.func @transform_5(%arg0: i32, %arg1: i32, %arg2: i32) -> (i32, i32) {
    %c0_i32 = arith.constant 0 : i32
    return %arg0, %arg1 : i32, i32
  }
}

</mosaic_0001>

<llo_original>
// kernel: tpu_custom_call.1
$region0: #{tpu_custom_call.1}
  #allocation0 [shape = 'u32[]', space=smem, size = 0x4, offset = 0x4, fixed_abs, tag = 'smem constant byte address 0x4 - core index']
  #allocation1 [shape = 'u32[144,128]{1,0:T(1,128)}', space=vmem, size = 0x12000, scoped, tag = 'internal scratch']
  #allocation2 [shape = 'f32[16,128]{1,0:T(8,128)}', space=vmem, size = 0x2000, scoped, tag = 'scratch operand']
  %s0 = inlined_call_operand.hbm [shape: bf16[16,128], index: 0, kind: input, shape index: {}]
  %s1 = inlined_call_operand.hbm [shape: bf16[128,128], index: 1, kind: input, shape index: {}]
  %s2 = inlined_call_operand.vmem [shape: f32[1,128], index: 2, kind: input, shape index: {}]
  %s3 = inlined_call_operand.vmem [shape: bf16[16,128], index: 3, kind: input, shape index: {}]
  %s4 = inlined_call_operand.hbm [shape: bf16[128,128], index: 4, kind: input, shape index: {}]
  %s5 = inlined_call_operand.hbm [shape: f32[16,128], index: 5, kind: output, shape index: {}]
  %s6 = sld [smem:[#allocation0]]
  $region50: #{tpu_custom_call.1} parent=0
    _
  %s8 = ssub.s32 1, %s6
  %s9 = scalar_select 0, %s8, %s6
  $region1: #{tpu_custom_call.1} parent=0
    #allocation3 [shape = 'u8[4096]{0}', space=vmem, size = 0x1000, scoped, tag = 'input window, operand 0, single buffered']
    #allocation4 [shape = 's32[1]{0}', space=sflag, size = 0x4, scoped, tag = 'scoped memory for tpu_custom_call.1']
    #allocation5 [shape = 's32[1]{0}', space=sflag, size = 0x4, scoped, tag = 'scoped memory for tpu_custom_call.1']
    #allocation6 [shape = 'u8[32768]{0}', space=vmem, size = 0x8000, scoped, tag = 'input window, operand 1, single buffered']
    #allocation7 [shape = 's32[1]{0}', space=sflag, size = 0x4, scoped, tag = 'scoped memory for tpu_custom_call.1']
    #allocation8 [shape = 'u8[32768]{0}', space=vmem, size = 0x8000, scoped, tag = 'input window, operand 4, single buffered']
    #allocation9 [shape = 'u8[8192]{0}', space=vmem, size = 0x2000, scoped, tag = 'output window, operand 0, single buffered']
    %10 = vsyncpa [#allocation4], 0
    %11 = vsyncpa [#allocation7], 0
    %12 = vsyncpa [#allocation5], 0
    // Predicated region
    $region2: #{tpu_custom_call.1} parent=1 // pred_check
      _
    $region3: #{tpu_custom_call.1} parent=1 // pred_check_branch
      %14 = sbr.rel (0) target = $region5
    $region4: #{tpu_custom_call.1} parent=1 // pred_region
      %s16 = ssub.s32 128, 128
      %17 = vsyncadd [#allocation4], %s16
      %s18 = sshll.u32 [#allocation3], 4
      %s19 = int_to_ptr.vmem [resolvable:$true] %s18
      %24 = dma.hbm_to_vmem [thread:$0]  %s0, 128, %s19, [#allocation4], 64, 64, 4
    $region5: #{tpu_custom_call.1} parent=1 // pred_fallthru
      _
    // Predicated region
    $region6: #{tpu_custom_call.1} parent=1 // pred_check
      _
    $region7: #{tpu_custom_call.1} parent=1 // pred_check_branch
      %26 = sbr.rel (0) target = $region9
    $region8: #{tpu_custom_call.1} parent=1 // pred_region
      %s28 = ssub.s32 1024, 1024
      %29 = vsyncadd [#allocation7], %s28
      %s30 = sshll.u32 [#allocation6], 4
      %s31 = int_to_ptr.vmem [resolvable:$true] %s30
      %36 = dma.hbm_to_vmem [thread:$0]  %s1, 1024, %s31, [#allocation7], 64, 64, 4
    $region9: #{tpu_custom_call.1} parent=1 // pred_fallthru
      _
    // Predicated region
    $region10: #{tpu_custom_call.1} parent=1 // pred_check
      _
    $region11: #{tpu_custom_call.1} parent=1 // pred_check_branch
      %38 = sbr.rel (0) target = $region13
    $region12: #{tpu_custom_call.1} parent=1 // pred_region
      _
    $region13: #{tpu_custom_call.1} parent=1 // pred_fallthru
      _
    // Predicated region
    $region14: #{tpu_custom_call.1} parent=1 // pred_check
      _
    $region15: #{tpu_custom_call.1} parent=1 // pred_check_branch
      %40 = sbr.rel (0) target = $region17
    $region16: #{tpu_custom_call.1} parent=1 // pred_region
      _
    $region17: #{tpu_custom_call.1} parent=1 // pred_fallthru
      _
    // Predicated region
    $region18: #{tpu_custom_call.1} parent=1 // pred_check
      _
    $region19: #{tpu_custom_call.1} parent=1 // pred_check_branch
      %42 = sbr.rel (0) target = $region21
    $region20: #{tpu_custom_call.1} parent=1 // pred_region
      %s44 = ssub.s32 1024, 1024
      %45 = vsyncadd [#allocation7], %s44
      %s46 = sshll.u32 [#allocation8], 4
      %s47 = int_to_ptr.vmem [resolvable:$true] %s46
      %52 = dma.hbm_to_vmem [thread:$0]  %s4, 1024, %s47, [#allocation7], 64, 64, 4
    $region21: #{tpu_custom_call.1} parent=1 // pred_fallthru
      _
    // Predicated region
    $region22: #{tpu_custom_call.1} parent=1 // pred_check
      _
    $region23: #{tpu_custom_call.1} parent=1 // pred_check_branch
      %54 = sbr.rel (0) target = $region25
    $region24: #{tpu_custom_call.1} parent=1 // pred_region
      %55 = dma.done [#allocation4], 128
    $region25: #{tpu_custom_call.1} parent=1 // pred_fallthru
      _
    // Predicated region
    $region26: #{tpu_custom_call.1} parent=1 // pred_check
      _
    $region27: #{tpu_custom_call.1} parent=1 // pred_check_branch
      %57 = sbr.rel (0) target = $region29
    $region28: #{tpu_custom_call.1} parent=1 // pred_region
      %58 = dma.done [#allocation7], 1024
    $region29: #{tpu_custom_call.1} parent=1 // pred_fallthru
      _
    // Predicated region
    $region30: #{tpu_custom_call.1} parent=1 // pred_check
      _
    $region31: #{tpu_custom_call.1} parent=1 // pred_check_branch
      %60 = sbr.rel (0) target = $region33
    $region32: #{tpu_custom_call.1} parent=1 // pred_region
      %61 = dma.done [#allocation7], 1024
    $region33: #{tpu_custom_call.1} parent=1 // pred_fallthru
      _
    %p63 = scmp.eq.s32.totalorder 0, 0
    // Predicated region
    $region34: #{tpu_custom_call.1} parent=1 // pred_check
      %p64 = pneg %p63
    $region35: #{tpu_custom_call.1} parent=1 // pred_check_branch
      %66 = sbr.rel (%p64) target = $region37
    $region36: #{tpu_custom_call.1} parent=1 // pred_region
      %67 = vst [vmem:[#allocation2] sm:$0xff] 0.0
      %68 = vst [vmem:[#allocation2 + $0x8] sm:$0xff] 0.0
    $region37: #{tpu_custom_call.1} parent=1 // pred_fallthru
      _
    %v69 = vld [vmem:[#allocation2] sm:$0xff]
    %v70 = vld [vmem:[#allocation2 + $0x8] sm:$0xff]
    %v71 = vld [vmem:[#allocation3] sm:$0xf]
    %v72 = vld [vmem:[#allocation3 + $0x4] sm:$0xf]
    %v73 = vld [vmem:[#allocation6] sm:$0xf]
    %v74 = vld [vmem:[#allocation6 + $0x4] sm:$0xf]
    %v75 = vld [vmem:[#allocation6 + $0x8] sm:$0xf]
    %v76 = vld [vmem:[#allocation6 + $0xc] sm:$0xf]
    %v77 = vld [vmem:[#allocation6 + $0x10] sm:$0xf]
    %v78 = vld [vmem:[#allocation6 + $0x14] sm:$0xf]
    %v79 = vld [vmem:[#allocation6 + $0x18] sm:$0xf]
    %v80 = vld [vmem:[#allocation6 + $0x1c] sm:$0xf]
    %v81 = vld [vmem:[#allocation6 + $0x20] sm:$0xf]
    %v82 = vld [vmem:[#allocation6 + $0x24] sm:$0xf]
    %v83 = vld [vmem:[#allocation6 + $0x28] sm:$0xf]
    %v84 = vld [vmem:[#allocation6 + $0x2c] sm:$0xf]
    %v85 = vld [vmem:[#allocation6 + $0x30] sm:$0xf]
    %v86 = vld [vmem:[#allocation6 + $0x34] sm:$0xf]
    %v87 = vld [vmem:[#allocation6 + $0x38] sm:$0xf]
    %v88 = vld [vmem:[#allocation6 + $0x3c] sm:$0xf]
    %v91 = vunpack.c.l.b16 %v71
    %v92 = vunpack.c.l.b16 %v72
    %v93 = vpack.c.b16 %v92, %v91
    %v111 = vunpack.c.l.b16 %v73
    %v112 = vunpack.c.l.b16 %v74
    %v113 = vunpack.c.l.b16 %v75
    %v114 = vunpack.c.l.b16 %v76
    %v115 = vunpack.c.l.b16 %v77
    %v116 = vunpack.c.l.b16 %v78
    %v117 = vunpack.c.l.b16 %v79
    %v118 = vunpack.c.l.b16 %v80
    %v119 = vunpack.c.l.b16 %v81
    %v120 = vunpack.c.l.b16 %v82
    %v121 = vunpack.c.l.b16 %v83
    %v122 = vunpack.c.l.b16 %v84
    %v123 = vunpack.c.l.b16 %v85
    %v124 = vunpack.c.l.b16 %v86
    %v125 = vunpack.c.l.b16 %v87
    %v126 = vunpack.c.l.b16 %v88
    %v127 = vpack.c.b16 %v112, %v111
    %v128 = vpack.c.b16 %v114, %v113
    %v129 = vpack.c.b16 %v116, %v115
    %v130 = vpack.c.b16 %v118, %v117
    %v131 = vpack.c.b16 %v120, %v119
    %v132 = vpack.c.b16 %v122, %v121
    %v133 = vpack.c.b16 %v124, %v123
    %v134 = vpack.c.b16 %v126, %v125
    %143 = vmatprep.subr.bf16.mxu0 0
    %144 = vmatpush1.bf16.msra.mxu0 %v127
    %145 = vmatprep.subr.bf16.mxu0 0
    %146 = vmatpush1.bf16.msra.mxu0 %v128
    %147 = vmatprep.subr.bf16.mxu0 0
    %148 = vmatpush1.bf16.msra.mxu0 %v129
    %149 = vmatprep.subr.bf16.mxu0 0
    %150 = vmatpush1.bf16.msra.mxu0 %v130
    %151 = vmatprep.subr.bf16.mxu0 0
    %152 = vmatpush1.bf16.msra.mxu0 %v131
    %153 = vmatprep.subr.bf16.mxu0 0
    %154 = vmatpush1.bf16.msra.mxu0 %v132
    %155 = vmatprep.subr.bf16.mxu0 0
    %156 = vmatpush1.bf16.msra.mxu0 %v133
    %157 = vmatprep.subr.bf16.mxu0 0
    %158 = vmatpush1.bf16.msra.mxu0 %v134
    %159 = vmatprep.subr.bf16.mxu0 0
    %160 = vmatpush1.bf16.msra.mxu0 0
    %161 = vmatprep.subr.bf16.mxu0 0
    %162 = vmatpush1.bf16.msra.mxu0 0
    %163 = vmatprep.subr.bf16.mxu0 0
    %164 = vmatpush1.bf16.msra.mxu0 0
    %165 = vmatprep.subr.bf16.mxu0 0
    %166 = vmatpush1.bf16.msra.mxu0 0
    %167 = vmatprep.subr.bf16.mxu0 0
    %168 = vmatpush1.bf16.msra.mxu0 0
    %169 = vmatprep.subr.bf16.mxu0 0
    %170 = vmatpush1.bf16.msra.mxu0 0
    %171 = vmatprep.subr.bf16.mxu0 0
    %172 = vmatpush1.bf16.msra.mxu0 0
    %173 = vmatprep.subr.bf16.mxu0 0
    %174 = vmatpush1.bf16.msra.mxu0 0
    %175 = vmatprep.mubr.bf16.mxu0 0
    %176 = vmatmul.mubr.bf16.gmra.mrb[0].mxu0 %v93
    %v177 = vpop.f32.mrb[0].mxu0
    %v178 = vadd.f32 0.0, %v177
    %v179 = vpop.f32.mrb[0].mxu0
    %v180 = vpop.f32.mrb[0].mxu0
    %v181 = vadd.f32 0.0, %v180
    %v182 = vpop.f32.mrb[0].mxu0
    %183 = vdwg.mxu0
    %v184 = vadd.f32 %v69, %v178
    %v185 = vadd.f32 %v70, %v181
    %186 = vst [vmem:[#allocation2] sm:$0xff] %v184
    %187 = vst [vmem:[#allocation2 + $0x8] sm:$0xff] %v185
    // Predicated region
    $region38: #{tpu_custom_call.1} parent=1 // pred_check
      %p188 = pneg %p63
    $region39: #{tpu_custom_call.1} parent=1 // pred_check_branch
      %190 = sbr.rel (%p188) target = $region41
    $region40: #{tpu_custom_call.1} parent=1 // pred_region
      %v191 = vld [vmem:[%s3] sm:$0xf]
      %v192 = vld [vmem:[%s3 + $0x4] sm:$0xf]
      %v193 = vld [vmem:[#allocation8] sm:$0xf]
      %v194 = vld [vmem:[#allocation8 + $0x4] sm:$0xf]
      %v195 = vld [vmem:[#allocation8 + $0x8] sm:$0xf]
      %v196 = vld [vmem:[#allocation8 + $0xc] sm:$0xf]
      %v197 = vld [vmem:[#allocation8 + $0x10] sm:$0xf]
      %v198 = vld [vmem:[#allocation8 + $0x14] sm:$0xf]
      %v199 = vld [vmem:[#allocation8 + $0x18] sm:$0xf]
      %v200 = vld [vmem:[#allocation8 + $0x1c] sm:$0xf]
      %v201 = vld [vmem:[#allocation8 + $0x20] sm:$0xf]
      %v202 = vld [vmem:[#allocation8 + $0x24] sm:$0xf]
      %v203 = vld [vmem:[#allocation8 + $0x28] sm:$0xf]
      %v204 = vld [vmem:[#allocation8 + $0x2c] sm:$0xf]
      %v205 = vld [vmem:[#allocation8 + $0x30] sm:$0xf]
      %v206 = vld [vmem:[#allocation8 + $0x34] sm:$0xf]
      %v207 = vld [vmem:[#allocation8 + $0x38] sm:$0xf]
      %v208 = vld [vmem:[#allocation8 + $0x3c] sm:$0xf]
      %v211 = vunpack.c.l.b16 %v191
      %v212 = vunpack.c.l.b16 %v192
      %v213 = vpack.c.b16 %v212, %v211
      %v231 = vunpack.c.l.b16 %v193
      %v232 = vunpack.c.l.b16 %v194
      %v233 = vunpack.c.l.b16 %v195
      %v234 = vunpack.c.l.b16 %v196
      %v235 = vunpack.c.l.b16 %v197
      %v236 = vunpack.c.l.b16 %v198
      %v237 = vunpack.c.l.b16 %v199
      %v238 = vunpack.c.l.b16 %v200
      %v239 = vunpack.c.l.b16 %v201
      %v240 = vunpack.c.l.b16 %v202
      %v241 = vunpack.c.l.b16 %v203
      %v242 = vunpack.c.l.b16 %v204
      %v243 = vunpack.c.l.b16 %v205
      %v244 = vunpack.c.l.b16 %v206
      %v245 = vunpack.c.l.b16 %v207
      %v246 = vunpack.c.l.b16 %v208
      %v247 = vpack.c.b16 %v232, %v231
      %v248 = vpack.c.b16 %v234, %v233
      %v249 = vpack.c.b16 %v236, %v235
      %v250 = vpack.c.b16 %v238, %v237
      %v251 = vpack.c.b16 %v240, %v239
      %v252 = vpack.c.b16 %v242, %v241
      %v253 = vpack.c.b16 %v244, %v243
      %v254 = vpack.c.b16 %v246, %v245
      %263 = vmatprep.subr.bf16.mxu0 0
      %264 = vmatpush1.bf16.msra.mxu0 %v247
      %265 = vmatprep.subr.bf16.mxu0 0
      %266 = vmatpush1.bf16.msra.mxu0 %v248
      %267 = vmatprep.subr.bf16.mxu0 0
      %268 = vmatpush1.bf16.msra.mxu0 %v249
      %269 = vmatprep.subr.bf16.mxu0 0
      %270 = vmatpush1.bf16.msra.mxu0 %v250
      %271 = vmatprep.subr.bf16.mxu0 0
      %272 = vmatpush1.bf16.msra.mxu0 %v251
      %273 = vmatprep.subr.bf16.mxu0 0
      %274 = vmatpush1.bf16.msra.mxu0 %v252
      %275 = vmatprep.subr.bf16.mxu0 0
      %276 = vmatpush1.bf16.msra.mxu0 %v253
      %277 = vmatprep.subr.bf16.mxu0 0
      %278 = vmatpush1.bf16.msra.mxu0 %v254
      %279 = vmatprep.subr.bf16.mxu0 0
      %280 = vmatpush1.bf16.msra.mxu0 0
      %281 = vmatprep.subr.bf16.mxu0 0
      %282 = vmatpush1.bf16.msra.mxu0 0
      %283 = vmatprep.subr.bf16.mxu0 0
      %284 = vmatpush1.bf16.msra.mxu0 0
      %285 = vmatprep.subr.bf16.mxu0 0
      %286 = vmatpush1.bf16.msra.mxu0 0
      %287 = vmatprep.subr.bf16.mxu0 0
      %288 = vmatpush1.bf16.msra.mxu0 0
      %289 = vmatprep.subr.bf16.mxu0 0
      %290 = vmatpush1.bf16.msra.mxu0 0
      %291 = vmatprep.subr.bf16.mxu0 0
      %292 = vmatpush1.bf16.msra.mxu0 0
      %293 = vmatprep.subr.bf16.mxu0 0
      %294 = vmatpush1.bf16.msra.mxu0 0
      %295 = vmatprep.mubr.bf16.mxu0 0
      %296 = vmatmul.mubr.bf16.gmra.mrb[0].mxu0 %v213
      %v297 = vpop.f32.mrb[0].mxu0
      %v298 = vadd.f32 0.0, %v297
      %v299 = vpop.f32.mrb[0].mxu0
      %v300 = vpop.f32.mrb[0].mxu0
      %v301 = vadd.f32 0.0, %v300
      %v302 = vpop.f32.mrb[0].mxu0
      %303 = vdwg.mxu0
      %v304 = vld [vmem:[#allocation2] sm:$0xff]
      %v305 = vld [vmem:[#allocation2 + $0x8] sm:$0xff]
      %v306 = vld [vmem:[%s2] sm:$0x1]
      %v308 = vlaneseq
      %v309 = vshrl.u32 %v308, 7
      %v310 = vsub.s32 0, %v309
      %v311 = vrot.slane %v306, %v310
      %v313 = vadd.f32 %v304, %v311
      %v314 = vadd.f32 %v305, %v311
      %v315 = vadd.f32 %v313, %v298
      %v316 = vadd.f32 %v314, %v301
      %317 = vst [vmem:[#allocation9] sm:$0xff] %v315
      %318 = vst [vmem:[#allocation9 + $0x8] sm:$0xff] %v316
    $region41: #{tpu_custom_call.1} parent=1 // pred_fallthru
      _
    // Predicated region
    $region42: #{tpu_custom_call.1} parent=1 // pred_check
      _
    $region43: #{tpu_custom_call.1} parent=1 // pred_check_branch
      %320 = sbr.rel (0) target = $region45
    $region44: #{tpu_custom_call.1} parent=1 // pred_region
      %s322 = ssub.s32 256, 256
      %323 = vsyncadd [#allocation5], %s322
      %s324 = sshll.u32 [#allocation9], 4
      %s325 = int_to_ptr.vmem [resolvable:$true] %s324
      %330 = dma.vmem_to_hbm [thread:$0]  %s325, 256, %s5, [#allocation5], 128, 128, 8
    $region45: #{tpu_custom_call.1} parent=1 // pred_fallthru
      _
    // Predicated region
    $region46: #{tpu_custom_call.1} parent=1 // pred_check
      _
    $region47: #{tpu_custom_call.1} parent=1 // pred_check_branch
      %332 = sbr.rel (0) target = $region49
    $region48: #{tpu_custom_call.1} parent=1 // pred_region
      %333 = dma.done [#allocation5], 256
    $region49: #{tpu_custom_call.1} parent=1 // pred_fallthru
      _
    %334 = vsyncpa [#allocation4], 1
    %335 = vsyncpa [#allocation7], 1
    %336 = vsyncpa [#allocation5], 1

</llo_original>
